<compile_context>
chip_gen: v6e
topology: v6e:2x2x1
jax: 0.10.0
libtpu: 0.0.40
codegen_flags: <defaults>
</compile_context>

<pallas_src>
import math

import jax
import jax.numpy as jnp
from jax.experimental import pallas as pl
from jax.experimental.pallas import tpu as pltpu


# ----------------------------------------------------------------------------
# Kernel 1: gumbel-softmax over the input_dim axis (axis 0), computed once.
# ----------------------------------------------------------------------------
def gumbel_softmax_kernel(inv_temp_ref, logits_ref, gumbel_ref, sel_ref):
    inv_temp = inv_temp_ref[0]                         # scalar from SMEM
    z = (logits_ref[...] + gumbel_ref[...]) * inv_temp  # (Din_p, Dout_p)
    # numerically stable softmax over the input_dim axis (axis 0)
    z = z - jnp.max(z, axis=0, keepdims=True)
    e = jnp.exp(z)
    denom = jnp.sum(e, axis=0, keepdims=True)
    sel_ref[...] = e / denom


# ----------------------------------------------------------------------------
# Kernel 2: Y = X @ selection, tiled over (batch, Din) with f32 accumulator.
# ----------------------------------------------------------------------------
def select_matmul_kernel(x_ref, sel_ref, y_ref, acc_ref):
    @pl.when(pl.program_id(1) == 0)
    def _():
        acc_ref[...] = jnp.zeros_like(acc_ref)

    # bf16 operands (native MXU path on v5e/v6e), f32 accumulation.
    acc_ref[...] += jnp.dot(
        x_ref[...].astype(jnp.bfloat16),
        sel_ref[...].astype(jnp.bfloat16),
        preferred_element_type=jnp.float32,
    )

    @pl.when(pl.program_id(1) == pl.num_programs(1) - 1)
    def _():
        y_ref[...] = acc_ref[...].astype(y_ref.dtype)


# ----------------------------------------------------------------------------
# Wrapper
# ----------------------------------------------------------------------------
def _round_up(a, m):
    return (a + m - 1) // m * m


def _select_matmul(x_p, sel_p, B_p, Din_p, Dout_p, TILE_B, TILE_K):
    grid = (B_p // TILE_B, Din_p // TILE_K)
    return pl.pallas_call(
        select_matmul_kernel,
        out_shape=jax.ShapeDtypeStruct((B_p, Dout_p), jnp.float32),
        grid_spec=pltpu.PrefetchScalarGridSpec(
            num_scalar_prefetch=0,
            grid=grid,
            in_specs=[
                pl.BlockSpec((TILE_B, TILE_K), lambda i, k: (i, k)),   # X tile
                pl.BlockSpec((TILE_K, Dout_p), lambda i, k: (k, 0)),   # sel tile
            ],
            out_specs=pl.BlockSpec((TILE_B, Dout_p), lambda i, k: (i, 0)),
            scratch_shapes=[pltpu.VMEM((TILE_B, Dout_p), jnp.float32)],
        ),
        compiler_params=pltpu.CompilerParams(
            dimension_semantics=("parallel", "arbitrary"),
        ),
        cost_estimate=pl.CostEstimate(
            flops=2 * B_p * Din_p * Dout_p,
            transcendentals=0,
            bytes_accessed=(B_p * Din_p + Din_p * Dout_p + B_p * Dout_p) * 4,
        ),
    )(x_p, sel_p)


def concrete_select_forward(x, logits, temp, key, *, training=True,
                            tile_b=256, tile_k=512):
    """Forward of ConcreteSelectLayer.

    x:      (B, Din) float32
    logits: (Din, Dout) float32
    temp:   python float / scalar temperature (training mode)
    key:    jax PRNG key for the Gumbel noise (training mode)
    returns (Y (B, Dout), selection (Din, Dout))
    """
    B, Din = x.shape
    Din2, Dout = logits.shape
    assert Din == Din2

    # --- pad to lane/sublane-dense shapes --------------------------------
    Dout_p = _round_up(Dout, 128)                 # lane-dense outputs
    B_p = _round_up(B, 8)
    TILE_B = min(tile_b, B_p)
    B_p = _round_up(B_p, TILE_B)
    Din_p = _round_up(Din, 128)
    TILE_K = min(tile_k, Din_p)
    Din_p = _round_up(Din_p, TILE_K)
    # Tile VMEM budget (f32): 2*TILE_B*TILE_K + 2*TILE_K*Dout_p
    #   + 3*TILE_B*Dout_p  ~= a few MiB for the defaults above, well under the
    #   32 MiB scoped default on v7x (64 MiB physical).

    x_p = jnp.zeros((B_p, Din_p), jnp.float32).at[:B, :Din].set(x)

    if training:
        # Padded logit rows -> large negative so softmax assigns them ~0 prob.
        logits_p = (jnp.full((Din_p, Dout_p), -1e9, jnp.float32)
                    .at[:Din, :Dout].set(logits))
        # Standard Gumbel(0,1) noise (matches F.gumbel_softmax), generated in
        # plain JAX so the kernel has no TPU-only PRNG primitives.
        gumbel_p = jax.random.gumbel(key, (Din_p, Dout_p), dtype=jnp.float32)
        inv_temp_arr = jnp.asarray([1.0 / float(temp)], dtype=jnp.float32)

        # --- kernel 1: selection (computed once, reused by every batch tile)
        # TODO(synk): for very large Din (10k-100k features) this kernel should
        # itself stream Din with an online softmax; left whole-block here.
        sel_p = pl.pallas_call(
            gumbel_softmax_kernel,
            out_shape=jax.ShapeDtypeStruct((Din_p, Dout_p), jnp.float32),
            in_specs=[
                pl.BlockSpec(memory_space=pltpu.MemorySpace.SMEM),   # inv_temp
                pl.BlockSpec((Din_p, Dout_p), lambda: (0, 0)),       # logits
                pl.BlockSpec((Din_p, Dout_p), lambda: (0, 0)),       # gumbel
            ],
            out_specs=pl.BlockSpec((Din_p, Dout_p), lambda: (0, 0)),
            cost_estimate=pl.CostEstimate(
                flops=6 * Din_p * Dout_p,
                transcendentals=Din_p * Dout_p,
                bytes_accessed=3 * Din_p * Dout_p * 4,
            ),
        )(inv_temp_arr, logits_p, gumbel_p)
    else:
        # Eval mode: hard one-hot selection of argmax(logits, dim=0).
        idx = jnp.argmax(logits, axis=0)                       # (Dout,)
        sel = jax.nn.one_hot(idx, Din, dtype=jnp.float32).T    # (Din, Dout)
        sel_p = jnp.zeros((Din_p, Dout_p), jnp.float32).at[:Din, :Dout].set(sel)

    # --- kernel 2: Y = X @ selection, pipelined tiled matmul --------------
    y_p = _select_matmul(x_p, sel_p, B_p, Din_p, Dout_p, TILE_B, TILE_K)

    return y_p[:B, :Dout], sel_p[:Din, :Dout]


# ----------------------------------------------------------------------------
# Glue: temperature schedule (matches the PyTorch module)
# ----------------------------------------------------------------------------
def get_temp(epoch, n_epochs, start_temp=10.0, min_temp=0.05, mode="exp"):
    if mode == "exp":
        t = start_temp * (min_temp / start_temp) ** (epoch / n_epochs)
    elif mode == "lin":
        t = start_temp - (start_temp - min_temp) * (epoch / n_epochs)
    elif mode == "cos":
        t = min_temp + 0.5 * (start_temp - min_temp) * (
            1.0 + math.cos(epoch * math.pi / n_epochs))
    else:
        raise ValueError(mode)
    return max(min_temp, t)


if __name__ == "__main__":
    # Small shapes consistent with the module: X is (batch, input_dim),
    # logits is (input_dim, output_dim).
    B, Din, Dout = 16, 32, 8
    n_epochs, epoch = 100, 10

    key = jax.random.PRNGKey(0)
    k_logits, k_x, k_gumbel = jax.random.split(key, 3)

    # xavier_normal_ init: std = sqrt(2 / (fan_in + fan_out))
    std = math.sqrt(2.0 / (Din + Dout))
    logits = std * jax.random.normal(k_logits, (Din, Dout), dtype=jnp.float32)
    x = jax.random.normal(k_x, (B, Din), dtype=jnp.float32)

    temp = get_temp(epoch, n_epochs)

    y, sel = concrete_select_forward(x, logits, temp, k_gumbel, training=True)
    jax.block_until_ready((y, sel))

    # sanity: shapes, selection columns are distributions over input dims,
    # and Y == X @ selection (bf16 MXU operands / f32 accumulate tolerance).
    assert y.shape == (B, Dout) and sel.shape == (Din, Dout)
    assert jnp.allclose(jnp.sum(sel, axis=0), 1.0, atol=1e-4)
    y_ref = x @ sel
    assert jnp.allclose(y, y_ref, atol=5e-2, rtol=5e-2)

    # eval-mode path (hard one-hot selection) also exercised once.
    y_eval, sel_eval = concrete_select_forward(
        x, logits, temp, k_gumbel, training=False)
    jax.block_until_ready((y_eval, sel_eval))
    assert jnp.allclose(jnp.sum(sel_eval, axis=0), 1.0, atol=1e-6)

    print("KERNEL_OK")
</pallas_src>

<mosaic_0001>
module attributes {stable_mosaic.version = 11 : i64} {
  func.func @gumbel_softmax_kernel(%arg0: memref<1xf32, #tpu.memory_space<smem>>, %arg1: memref<128x128xf32, #tpu.memory_space<vmem>>, %arg2: memref<128x128xf32, #tpu.memory_space<vmem>>, %arg3: memref<128x128xf32, #tpu.memory_space<vmem>>) attributes {dimension_semantics = [], scalar_prefetch = 0 : i64, scratch_operands = 0 : i64, tpu.core_type = #tpu.core_type<tc>} {
    %c0 = arith.constant 0 : index
    %0 = memref.load %arg0[%c0] : memref<1xf32, #tpu.memory_space<smem>>
    %c0_0 = arith.constant 0 : index
    %c0_1 = arith.constant 0 : index
    %1 = vector.load %arg1[%c0_0, %c0_1] : memref<128x128xf32, #tpu.memory_space<vmem>>, vector<128x128xf32>
    %c0_2 = arith.constant 0 : index
    %c0_3 = arith.constant 0 : index
    %2 = vector.load %arg2[%c0_2, %c0_3] : memref<128x128xf32, #tpu.memory_space<vmem>>, vector<128x128xf32>
    %3 = arith.addf %1, %2 : vector<128x128xf32>
    %4 = vector.broadcast %0 : f32 to vector<128x128xf32>
    %5 = arith.mulf %3, %4 : vector<128x128xf32>
    %cst = arith.constant dense<0xFF800000> : vector<128xf32>
    %6 = vector.multi_reduction <maximumf>, %5, %cst [0] : vector<128x128xf32> to vector<128xf32>
    %7 = vector.shape_cast %6 : vector<128xf32> to vector<1x128xf32>
    %8 = vector.broadcast %7 : vector<1x128xf32> to vector<128x128xf32>
    %9 = arith.subf %5, %8 : vector<128x128xf32>
    %10 = math.exp %9 : vector<128x128xf32>
    %cst_4 = arith.constant dense<0.000000e+00> : vector<128xf32>
    %11 = vector.multi_reduction <add>, %10, %cst_4 [0] : vector<128x128xf32> to vector<128xf32>
    %12 = vector.shape_cast %11 : vector<128xf32> to vector<1x128xf32>
    %13 = vector.broadcast %12 : vector<1x128xf32> to vector<128x128xf32>
    %14 = arith.divf %10, %13 : vector<128x128xf32>
    %c0_5 = arith.constant 0 : index
    %c0_6 = arith.constant 0 : index
    %15 = vector.load %arg3[%c0_5, %c0_6] : memref<128x128xf32, #tpu.memory_space<vmem>>, vector<128x128xf32>
    tpu.vector_store %arg3[%c0_5, %c0_6], %14 {strides = array<i32>} : memref<128x128xf32, #tpu.memory_space<vmem>>, vector<128x128xf32>,
    return
  }
}

</mosaic_0001>

<llo_original>
// kernel: tpu_custom_call.1
$region0: #{tpu_custom_call.1}
  #allocation0 [shape = 'u32[]', space=smem, size = 0x4, offset = 0x4, fixed_abs, tag = 'smem constant byte address 0x4 - core index']
  #allocation1 [shape = 'u32[144,128]{1,0:T(1,128)}', space=vmem, size = 0x12000, scoped, tag = 'internal scratch']
  #allocation2 [shape = 'f32[1]{0:T(128)S(6)}', space=smem, size = 0x200, scoped, tag = 'scoped memory for tpu_custom_call.1']
  %s0 = inlined_call_operand.<no memory space> [shape: f32[1], index: 0, kind: input, shape index: {}]
  %s1 = inlined_call_operand.hbm [shape: f32[128,128], index: 1, kind: input, shape index: {}]
  %s2 = inlined_call_operand.hbm [shape: f32[128,128], index: 2, kind: input, shape index: {}]
  %s3 = inlined_call_operand.hbm [shape: f32[128,128], index: 3, kind: output, shape index: {}]
  %s4 = sld [smem:[#allocation0]]
  $region30: #{tpu_custom_call.1} parent=0
    _
  %s6 = ssub.s32 1, %s4
  %s7 = scalar_select 0, %s6, %s4
  %8 = sst [smem:[#allocation2]] %s0
  $region1: #{tpu_custom_call.1} parent=0
    #allocation3 [shape = 'u8[65536]{0}', space=vmem, size = 0x10000, scoped, tag = 'input window, operand 1, single buffered']
    #allocation4 [shape = 's32[1]{0}', space=sflag, size = 0x4, scoped, tag = 'scoped memory for tpu_custom_call.1']
    #allocation5 [shape = 's32[1]{0}', space=sflag, size = 0x4, scoped, tag = 'scoped memory for tpu_custom_call.1']
    #allocation6 [shape = 'u8[65536]{0}', space=vmem, size = 0x10000, scoped, tag = 'input window, operand 2, single buffered']
    #allocation7 [shape = 's32[1]{0}', space=sflag, size = 0x4, scoped, tag = 'scoped memory for tpu_custom_call.1']
    #allocation8 [shape = 'u8[65536]{0}', space=vmem, size = 0x10000, scoped, tag = 'output window, operand 0, single buffered']
    %9 = vsyncpa [#allocation4], 0
    %10 = vsyncpa [#allocation7], 0
    %11 = vsyncpa [#allocation5], 0
    // Predicated region
    $region2: #{tpu_custom_call.1} parent=1 // pred_check
      _
    $region3: #{tpu_custom_call.1} parent=1 // pred_check_branch
      %13 = sbr.rel (0) target = $region5
    $region4: #{tpu_custom_call.1} parent=1 // pred_region
      _
    $region5: #{tpu_custom_call.1} parent=1 // pred_fallthru
      _
    // Predicated region
    $region6: #{tpu_custom_call.1} parent=1 // pred_check
      _
    $region7: #{tpu_custom_call.1} parent=1 // pred_check_branch
      %15 = sbr.rel (0) target = $region9
    $region8: #{tpu_custom_call.1} parent=1 // pred_region
      %s17 = ssub.s32 2048, 2048
      %18 = vsyncadd [#allocation4], %s17
      %s19 = sshll.u32 [#allocation3], 4
      %s20 = int_to_ptr.vmem [resolvable:$true] %s19
      %25 = dma.hbm_to_vmem [thread:$0]  %s1, 2048, %s20, [#allocation4], 128, 128, 8
    $region9: #{tpu_custom_call.1} parent=1 // pred_fallthru
      _
    // Predicated region
    $region10: #{tpu_custom_call.1} parent=1 // pred_check
      _
    $region11: #{tpu_custom_call.1} parent=1 // pred_check_branch
      %27 = sbr.rel (0) target = $region13
    $region12: #{tpu_custom_call.1} parent=1 // pred_region
      %s29 = ssub.s32 2048, 2048
      %30 = vsyncadd [#allocation7], %s29
      %s31 = sshll.u32 [#allocation6], 4
      %s32 = int_to_ptr.vmem [resolvable:$true] %s31
      %37 = dma.hbm_to_vmem [thread:$0]  %s2, 2048, %s32, [#allocation7], 128, 128, 8
    $region13: #{tpu_custom_call.1} parent=1 // pred_fallthru
      _
    // Predicated region
    $region14: #{tpu_custom_call.1} parent=1 // pred_check
      _
    $region15: #{tpu_custom_call.1} parent=1 // pred_check_branch
      %39 = sbr.rel (0) target = $region17
    $region16: #{tpu_custom_call.1} parent=1 // pred_region
      %40 = dma.done [#allocation4], 2048
    $region17: #{tpu_custom_call.1} parent=1 // pred_fallthru
      _
    // Predicated region
    $region18: #{tpu_custom_call.1} parent=1 // pred_check
      _
    $region19: #{tpu_custom_call.1} parent=1 // pred_check_branch
      %42 = sbr.rel (0) target = $region21
    $region20: #{tpu_custom_call.1} parent=1 // pred_region
      %43 = dma.done [#allocation7], 2048
    $region21: #{tpu_custom_call.1} parent=1 // pred_fallthru
      _
    %s44 = sld [smem:[#allocation2]]
    %v45 = vld [vmem:[#allocation3] sm:$0xff]
    %v46 = vld [vmem:[#allocation3 + $0x8] sm:$0xff]
    %v47 = vld [vmem:[#allocation3 + $0x10] sm:$0xff]
    %v48 = vld [vmem:[#allocation3 + $0x18] sm:$0xff]
    %v49 = vld [vmem:[#allocation3 + $0x20] sm:$0xff]
    %v50 = vld [vmem:[#allocation3 + $0x28] sm:$0xff]
    %v51 = vld [vmem:[#allocation3 + $0x30] sm:$0xff]
    %v52 = vld [vmem:[#allocation3 + $0x38] sm:$0xff]
    %v53 = vld [vmem:[#allocation3 + $0x40] sm:$0xff]
    %v54 = vld [vmem:[#allocation3 + $0x48] sm:$0xff]
    %v55 = vld [vmem:[#allocation3 + $0x50] sm:$0xff]
    %v56 = vld [vmem:[#allocation3 + $0x58] sm:$0xff]
    %v57 = vld [vmem:[#allocation3 + $0x60] sm:$0xff]
    %v58 = vld [vmem:[#allocation3 + $0x68] sm:$0xff]
    %v59 = vld [vmem:[#allocation3 + $0x70] sm:$0xff]
    %v60 = vld [vmem:[#allocation3 + $0x78] sm:$0xff]
    %v61 = vld [vmem:[#allocation6] sm:$0xff]
    %v62 = vld [vmem:[#allocation6 + $0x8] sm:$0xff]
    %v63 = vld [vmem:[#allocation6 + $0x10] sm:$0xff]
    %v64 = vld [vmem:[#allocation6 + $0x18] sm:$0xff]
    %v65 = vld [vmem:[#allocation6 + $0x20] sm:$0xff]
    %v66 = vld [vmem:[#allocation6 + $0x28] sm:$0xff]
    %v67 = vld [vmem:[#allocation6 + $0x30] sm:$0xff]
    %v68 = vld [vmem:[#allocation6 + $0x38] sm:$0xff]
    %v69 = vld [vmem:[#allocation6 + $0x40] sm:$0xff]
    %v70 = vld [vmem:[#allocation6 + $0x48] sm:$0xff]
    %v71 = vld [vmem:[#allocation6 + $0x50] sm:$0xff]
    %v72 = vld [vmem:[#allocation6 + $0x58] sm:$0xff]
    %v73 = vld [vmem:[#allocation6 + $0x60] sm:$0xff]
    %v74 = vld [vmem:[#allocation6 + $0x68] sm:$0xff]
    %v75 = vld [vmem:[#allocation6 + $0x70] sm:$0xff]
    %v76 = vld [vmem:[#allocation6 + $0x78] sm:$0xff]
    %v77 = vadd.f32 %v45, %v61
    %v78 = vadd.f32 %v46, %v62
    %v79 = vadd.f32 %v47, %v63
    %v80 = vadd.f32 %v48, %v64
    %v81 = vadd.f32 %v49, %v65
    %v82 = vadd.f32 %v50, %v66
    %v83 = vadd.f32 %v51, %v67
    %v84 = vadd.f32 %v52, %v68
    %v85 = vadd.f32 %v53, %v69
    %v86 = vadd.f32 %v54, %v70
    %v87 = vadd.f32 %v55, %v71
    %v88 = vadd.f32 %v56, %v72
    %v89 = vadd.f32 %v57, %v73
    %v90 = vadd.f32 %v58, %v74
    %v91 = vadd.f32 %v59, %v75
    %v92 = vadd.f32 %v60, %v76
    %v93 = vstv %s44
    %v94 = vmul.f32 %v77, %v93
    %v95 = vmul.f32 %v78, %v93
    %v96 = vmul.f32 %v79, %v93
    %v97 = vmul.f32 %v80, %v93
    %v98 = vmul.f32 %v81, %v93
    %v99 = vmul.f32 %v82, %v93
    %v100 = vmul.f32 %v83, %v93
    %v101 = vmul.f32 %v84, %v93
    %v102 = vmul.f32 %v85, %v93
    %v103 = vmul.f32 %v86, %v93
    %v104 = vmul.f32 %v87, %v93
    %v105 = vmul.f32 %v88, %v93
    %v106 = vmul.f32 %v89, %v93
    %v107 = vmul.f32 %v90, %v93
    %v108 = vmul.f32 %v91, %v93
    %v109 = vmul.f32 %v92, %v93
    %v110 = vmax.f32 %v94, %v98
    %v111 = vmax.f32 %v95, %v99
    %v112 = vmax.f32 %v96, %v100
    %v113 = vmax.f32 %v97, %v101
    %v114 = vmax.f32 %v110, %v102
    %v115 = vmax.f32 %v111, %v103
    %v116 = vmax.f32 %v112, %v104
    %v117 = vmax.f32 %v113, %v105
    %v118 = vmax.f32 %v114, %v106
    %v119 = vmax.f32 %v115, %v107
    %v120 = vmax.f32 %v116, %v108
    %v121 = vmax.f32 %v117, %v109
    %v122 = vmax.f32 %v118, %v119
    %v123 = vmax.f32 %v120, %v121
    %v124 = vmax.f32 %v122, %v123
    %v125 = vrot.slane %v124, 4
    %v126 = vmax.f32 %v124, %v125
    %v127 = vrot.slane %v126, 2
    %v128 = vmax.f32 %v126, %v127
    %v129 = vrot.slane %v128, 1
    %v130 = vmax.f32 %v128, %v129
    %v131 = vsub.f32 %v94, %v130
    %v132 = vsub.f32 %v95, %v130
    %v133 = vsub.f32 %v96, %v130
    %v134 = vsub.f32 %v97, %v130
    %v135 = vsub.f32 %v98, %v130
    %v136 = vsub.f32 %v99, %v130
    %v137 = vsub.f32 %v100, %v130
    %v138 = vsub.f32 %v101, %v130
    %v139 = vsub.f32 %v102, %v130
    %v140 = vsub.f32 %v103, %v130
    %v141 = vsub.f32 %v104, %v130
    %v142 = vsub.f32 %v105, %v130
    %v143 = vsub.f32 %v106, %v130
    %v144 = vsub.f32 %v107, %v130
    %v145 = vsub.f32 %v108, %v130
    %v146 = vsub.f32 %v109, %v130
    %v147 = vmul.f32 %v131, 1.442695
    %v148 = vpow.pop %v147
    %v149 = vmul.f32 %v132, 1.442695
    %v150 = vpow.pop %v149
    %v151 = vmul.f32 %v133, 1.442695
    %v152 = vpow.pop %v151
    %v153 = vmul.f32 %v134, 1.442695
    %v154 = vpow.pop %v153
    %v155 = vmul.f32 %v135, 1.442695
    %v156 = vpow.pop %v155
    %v157 = vmul.f32 %v136, 1.442695
    %v158 = vpow.pop %v157
    %v159 = vmul.f32 %v137, 1.442695
    %v160 = vpow.pop %v159
    %v161 = vmul.f32 %v138, 1.442695
    %v162 = vpow.pop %v161
    %v163 = vmul.f32 %v139, 1.442695
    %v164 = vpow.pop %v163
    %v165 = vmul.f32 %v140, 1.442695
    %v166 = vpow.pop %v165
    %v167 = vmul.f32 %v141, 1.442695
    %v168 = vpow.pop %v167
    %v169 = vmul.f32 %v142, 1.442695
    %v170 = vpow.pop %v169
    %v171 = vmul.f32 %v143, 1.442695
    %v172 = vpow.pop %v171
    %v173 = vmul.f32 %v144, 1.442695
    %v174 = vpow.pop %v173
    %v175 = vmul.f32 %v145, 1.442695
    %v176 = vpow.pop %v175
    %v177 = vmul.f32 %v146, 1.442695
    %v178 = vpow.pop %v177
    %v179 = vadd.f32 %v148, %v150
    %v180 = vadd.f32 %v179, %v152
    %v181 = vadd.f32 %v180, %v154
    %v182 = vadd.f32 %v181, %v156
    %v183 = vadd.f32 %v182, %v158
    %v184 = vadd.f32 %v183, %v160
    %v185 = vadd.f32 %v184, %v162
    %v186 = vadd.f32 %v185, %v164
    %v187 = vadd.f32 %v186, %v166
    %v188 = vadd.f32 %v187, %v168
    %v189 = vadd.f32 %v188, %v170
    %v190 = vadd.f32 %v189, %v172
    %v191 = vadd.f32 %v190, %v174
    %v192 = vadd.f32 %v191, %v176
    %v193 = vadd.f32 %v192, %v178
    %v194 = vrot.slane %v193, 4
    %v195 = vadd.f32 %v193, %v194
    %v196 = vrot.slane %v195, 2
    %v197 = vadd.f32 %v195, %v196
    %v198 = vrot.slane %v197, 1
    %v199 = vadd.f32 %v197, %v198
    %v200 = vrcp.pop %v199
    %v201 = vmul.f32 %v148, %v200
    %v202 = vmul.f32 %v150, %v200
    %v203 = vmul.f32 %v152, %v200
    %v204 = vmul.f32 %v154, %v200
    %v205 = vmul.f32 %v156, %v200
    %v206 = vmul.f32 %v158, %v200
    %v207 = vmul.f32 %v160, %v200
    %v208 = vmul.f32 %v162, %v200
    %v209 = vmul.f32 %v164, %v200
    %v210 = vmul.f32 %v166, %v200
    %v211 = vmul.f32 %v168, %v200
    %v212 = vmul.f32 %v170, %v200
    %v213 = vmul.f32 %v172, %v200
    %v214 = vmul.f32 %v174, %v200
    %v215 = vmul.f32 %v176, %v200
    %v216 = vmul.f32 %v178, %v200
    %217 = vst [vmem:[#allocation8] sm:$0xff] %v201
    %218 = vst [vmem:[#allocation8 + $0x8] sm:$0xff] %v202
    %219 = vst [vmem:[#allocation8 + $0x10] sm:$0xff] %v203
    %220 = vst [vmem:[#allocation8 + $0x18] sm:$0xff] %v204
    %221 = vst [vmem:[#allocation8 + $0x20] sm:$0xff] %v205
    %222 = vst [vmem:[#allocation8 + $0x28] sm:$0xff] %v206
    %223 = vst [vmem:[#allocation8 + $0x30] sm:$0xff] %v207
    %224 = vst [vmem:[#allocation8 + $0x38] sm:$0xff] %v208
    %225 = vst [vmem:[#allocation8 + $0x40] sm:$0xff] %v209
    %226 = vst [vmem:[#allocation8 + $0x48] sm:$0xff] %v210
    %227 = vst [vmem:[#allocation8 + $0x50] sm:$0xff] %v211
    %228 = vst [vmem:[#allocation8 + $0x58] sm:$0xff] %v212
    %229 = vst [vmem:[#allocation8 + $0x60] sm:$0xff] %v213
    %230 = vst [vmem:[#allocation8 + $0x68] sm:$0xff] %v214
    %231 = vst [vmem:[#allocation8 + $0x70] sm:$0xff] %v215
    %232 = vst [vmem:[#allocation8 + $0x78] sm:$0xff] %v216
    // Predicated region
    $region22: #{tpu_custom_call.1} parent=1 // pred_check
      _
    $region23: #{tpu_custom_call.1} parent=1 // pred_check_branch
      %234 = sbr.rel (0) target = $region25
    $region24: #{tpu_custom_call.1} parent=1 // pred_region
      %s236 = ssub.s32 2048, 2048
      %237 = vsyncadd [#allocation5], %s236
      %s238 = sshll.u32 [#allocation8], 4
      %s239 = int_to_ptr.vmem [resolvable:$true] %s238
      %244 = dma.vmem_to_hbm [thread:$0]  %s239, 2048, %s3, [#allocation5], 128, 128, 8
    $region25: #{tpu_custom_call.1} parent=1 // pred_fallthru
      _
    // Predicated region
    $region26: #{tpu_custom_call.1} parent=1 // pred_check
      _
    $region27: #{tpu_custom_call.1} parent=1 // pred_check_branch
      %246 = sbr.rel (0) target = $region29
    $region28: #{tpu_custom_call.1} parent=1 // pred_region
      %247 = dma.done [#allocation5], 2048
    $region29: #{tpu_custom_call.1} parent=1 // pred_fallthru
      _
    %248 = vsyncpa [#allocation4], 1
    %249 = vsyncpa [#allocation7], 1
    %250 = vsyncpa [#allocation5], 1

</llo_original>
